<compile_context>
chip_gen: v5e
topology: v5e:2x2
jax: 0.10.0
libtpu: 0.0.40
codegen_flags: <defaults>
</compile_context>

<pallas_src>
import jax
import jax.numpy as jnp
from jax import lax
from jax.experimental import pallas as pl
from jax.experimental.pallas import tpu as pltpu

LANES = 128      # lane width
CHUNK_R = 32     # rows per vreg-resident chunk == int8 native (32,128) tile


def _round_up(v, m):
    return -(-v // m) * m


def _vmem_budget():
    """(tile budget, vmem_limit) — conservative for v7x's 64 MiB/TC, roomier on
    v5e/v6e (128 MiB physical)."""
    try:
        cap = pltpu.get_tpu_info().vmem_capacity_bytes
    except Exception:
        return 12 << 20, 32 << 20
    if cap >= (100 << 20):           # v5e / v6e
        return 24 << 20, 64 << 20
    return 12 << 20, 32 << 20        # v7x


def _choose_tile_r(R, T, bits_itemsize=1, budget_bytes=12 << 20, max_tile=2048):
    """Row-tile (sublane) size for the (R, 128) view.

    * a multiple of 32 when tiling (int8 native tile; also a multiple of the f32
      (8,128) tile), or exactly R when a single block covers everything;
    * sized from a double-buffered VMEM budget (kernel temporaries are tiny now
      that the inner loop is vreg-resident per 32-row chunk);
    * decoupled from divisibility of R — the partial last grid block is masked
      by Pallas, so no padding copy of the bit stream is ever needed;
    * prefers an even grid-step count >= 2 so v7x's two TensorCores stay busy.
    """
    # Double-buffered blocks per row of 128 lanes: x(f32) + out(f32) + bits(T i8)
    per_row = 2 * LANES * (4 + 4 + T * bits_itemsize)
    cap = max(32, min(max_tile, budget_bytes // per_row))
    cap -= cap % 32
    cap = max(cap, 32)

    if R <= cap and R <= 512:
        # Small problem: one full-extent block (always a legal block shape).
        return R

    # Tiled path: smallest even step count whose tile fits the cap, so each of
    # the T bits-DMA pieces stays as large as possible.
    R32 = _round_up(R, 32)
    steps = max(2, -(-R32 // cap))
    if steps % 2:
        steps += 1
    tile_r = _round_up(-(-R32 // steps), 32)
    return min(tile_r, cap)


def _make_stability_kernel(T, threshold, tile_r):
    thr = float(threshold)
    inv_len = 1.0 / float(T)
    unroll_T = T <= 64    # static unroll for short bit streams (pure vreg dataflow)

    def step(lhs, stable_len, bmask, t_f32, pos, neg, tax):
        # lhs after t steps == 2*one_cnt - t*(1+x); exceed <=> err_t > thr.
        lhs = lhs + jnp.where(bmask, pos, neg)
        exceed = jnp.abs(lhs) > t_f32 * tax          # rhs carry eliminated: t * tax
        stable_len = jnp.where(exceed, t_f32, stable_len)
        return lhs, stable_len

    def kernel(in_ref, bits_ref, out_ref):
        # in_ref  : VMEM (tile_r, 128) f32   -- clamped in_value tile
        # bits_ref: VMEM (T, tile_r, 128) i8 -- bit stream tile, values in {0,1}
        # out_ref : VMEM (tile_r, 128) f32   -- stability tile

        def process(r0, cr):
            # Everything below is (cr, 128) == at most 4 vregs per value; all
            # carries stay in vregs across the T loop.
            x = in_ref[pl.ds(r0, cr), :]
            c = 1.0 + x
            pos = 2.0 - c                 # contribution of a 1-bit: 2*b - (1+x)
            neg = -c                      # contribution of a 0-bit
            tax = thr * jnp.abs(x)        # per-step rhs increment; used as t*tax

            lhs = jnp.zeros_like(x)
            stable_len = jnp.zeros_like(x)

            if unroll_T:
                for t in range(1, T + 1):
                    bmask = bits_ref[t - 1, pl.ds(r0, cr), :] != 0
                    lhs, stable_len = step(lhs, stable_len, bmask,
                                           float(t), pos, neg, tax)
            else:
                def body(t, carry):
                    lhs, stable_len = carry
                    bmask = bits_ref[t, pl.ds(r0, cr), :] != 0
                    return step(lhs, stable_len, bmask,
                                (t + 1).astype(jnp.float32), pos, neg, tax)

                lhs, stable_len = lax.fori_loop(0, T, body, (lhs, stable_len),
                                                unroll=8)

            # stability = 1 - clamp(stable_len, 1, T)/T ; stable_len <= T always.
            out_ref[pl.ds(r0, cr), :] = (
                1.0 - jnp.maximum(stable_len, 1.0) * inv_len)

        full_chunks = tile_r // CHUNK_R
        rem = tile_r - full_chunks * CHUNK_R

        if full_chunks <= 4:
            for ci in range(full_chunks):          # static: full LLO visibility
                process(ci * CHUNK_R, CHUNK_R)
        else:
            @pl.loop(0, full_chunks)
            def _(ci):
                process(pl.multiple_of(ci * CHUNK_R, CHUNK_R), CHUNK_R)

        if rem:
            process(full_chunks * CHUNK_R, rem)

    return kernel


def stability_forward(in_value, bits, threshold=0.05):
    """Pallas Stability forward.

    in_value: any-shape float array (ProgError clamps to [-1, 1], scale=1).
    bits    : (T, *in_value.shape) bit stream; int8/uint8 preferred (no copy),
              other dtypes are converted once.
    """
    x = jnp.clip(in_value, -1.0, 1.0).astype(jnp.float32)
    orig_shape = x.shape
    n = int(x.size)
    T = int(bits.shape[0])
    assert tuple(bits.shape[1:]) == tuple(orig_shape), "bits must be (T, *in_value.shape)"

    # Keep HBM traffic on the dominant (T, ...) operand at 1 byte/element and
    # avoid a full read+write convert pass when it already is 1-byte integer.
    if bits.dtype not in (jnp.int8, jnp.uint8):
        bits = bits.astype(jnp.int8)

    xf = x.reshape(-1)
    bf = bits.reshape(T, -1)          # free reshape (contiguous)
    if n % LANES:
        # Rare ragged case: the lane-major (R, 128) view needs padding.
        # Padded x rows are garbage that gets sliced off (any pad constant is fine).
        # TODO(synk): handle the <128-element tail without copying the bit stream.
        pad = LANES - n % LANES
        xf = jnp.pad(xf, (0, pad), constant_values=1.0)
        bf = jnp.pad(bf, ((0, 0), (0, pad)))
    R = xf.shape[0] // LANES
    x2 = xf.reshape(R, LANES)
    bits3 = bf.reshape(T, R, LANES)   # free reshape (contiguous)

    budget_bytes, vmem_limit = _vmem_budget()
    tile_r = _choose_tile_r(R, T, bits_itemsize=bits3.dtype.itemsize,
                            budget_bytes=budget_bytes)
    grid = (pl.cdiv(R, tile_r),)      # partial last block is masked by Pallas

    out = pl.pallas_call(
        _make_stability_kernel(T, threshold, tile_r),
        out_shape=jax.ShapeDtypeStruct((R, LANES), jnp.float32),
        grid_spec=pltpu.PrefetchScalarGridSpec(
            num_scalar_prefetch=0,
            grid=grid,
            in_specs=[
                pl.BlockSpec((tile_r, LANES), lambda i: (i, 0)),        # in_value
                pl.BlockSpec((T, tile_r, LANES), lambda i: (0, i, 0)),  # bit stream
            ],
            out_specs=pl.BlockSpec((tile_r, LANES), lambda i: (i, 0)),
        ),
        compiler_params=pltpu.CompilerParams(
            dimension_semantics=("parallel",),
            vmem_limit_bytes=vmem_limit,
        ),
    )(x2, bits3)

    return out.reshape(-1)[:n].reshape(orig_shape)


def stability_ref(in_value, bits, threshold=0.05):
    """Pure-JAX reference mirroring PyTorch Monitor()/forward() exactly."""
    x = jnp.clip(in_value, -1.0, 1.0).astype(jnp.float32)
    T = bits.shape[0]
    one_cnt = jnp.zeros_like(x)
    stable_len = jnp.zeros_like(x)
    for t in range(1, T + 1):
        one_cnt = one_cnt + bits[t - 1].astype(jnp.float32)
        out_pp = one_cnt / jnp.float32(t) * 2.0 - 1.0
        err = jnp.abs((out_pp - x) / x)
        stable_len = stable_len + (err > threshold).astype(jnp.float32) * (
            jnp.float32(t) - stable_len)
    return 1.0 - jnp.clip(stable_len, 1.0, float(T)) / float(T)


if __name__ == "__main__":
    N, C, H, W = 2, 4, 16, 16   # 2048 elements = 16 rows x 128 lanes
    T = 8                        # bit-stream length (self.len after T Monitor calls)
    threshold = 0.05

    key = jax.random.PRNGKey(0)
    k_mag, k_sign, k_bits = jax.random.split(key, 3)
    # Keep |in_value| away from 0: ProgError's err divides by in_value.
    mag = jax.random.uniform(k_mag, (N, C, H, W), jnp.float32, 0.2, 0.9)
    sign = jnp.where(jax.random.bernoulli(k_sign, 0.5, (N, C, H, W)), 1.0, -1.0)
    in_value = mag * sign

    # Bipolar stochastic-computing bit stream: P(bit=1) = (x+1)/2, stored as int8.
    p = (jnp.clip(in_value, -1.0, 1.0) + 1.0) * 0.5
    bits = jax.random.bernoulli(k_bits, p, (T, N, C, H, W)).astype(jnp.int8)

    out = jax.block_until_ready(stability_forward(in_value, bits, threshold))

    # Validation: the kernel's divide-free threshold test may legitimately differ
    # from the reference only on elements whose progressive error sits within
    # float rounding of the threshold, so validate against a tiny threshold
    # envelope [ref(thr*(1-1e-3)), ref(thr*(1+1e-3))] (stability is monotone in
    # the threshold).
    ref = stability_ref(in_value, bits, threshold)
    ref_lo = stability_ref(in_value, bits, threshold * (1.0 - 1e-3))
    ref_hi = stability_ref(in_value, bits, threshold * (1.0 + 1e-3))
    lo = jnp.minimum(jnp.minimum(ref_lo, ref_hi), ref) - 1e-5
    hi = jnp.maximum(jnp.maximum(ref_lo, ref_hi), ref) + 1e-5

    assert out.shape == in_value.shape
    assert bool(jnp.all((out >= lo) & (out <= hi))), \
        "Pallas result outside reference envelope"
    print("KERNEL_OK")
</pallas_src>

<mosaic_0001>
module attributes {stable_mosaic.version = 11 : i64} {
  func.func @kernel(%arg0: i32, %arg1: memref<16x128xf32, #tpu.memory_space<vmem>>, %arg2: memref<8x16x128xi8, #tpu.memory_space<vmem>>, %arg3: memref<16x128xf32, #tpu.memory_space<vmem>>) attributes {dimension_semantics = [#tpu.dimension_semantics<parallel>], iteration_bounds = array<i64: 1>, scalar_prefetch = 0 : i64, scratch_operands = 0 : i64, tpu.core_type = #tpu.core_type<tc>, window_params = [{transform_indices = @transform_0, window_bounds = array<i64: 16, 128>}, {transform_indices = @transform_1, window_bounds = array<i64: 8, 16, 128>}, {transform_indices = @transform_2, window_bounds = array<i64: 16, 128>}]} {
    %c0 = arith.constant 0 : index
    %c0_0 = arith.constant 0 : index
    %0 = vector.load %arg1[%c0, %c0_0] : memref<16x128xf32, #tpu.memory_space<vmem>>, vector<16x128xf32>
    %cst = arith.constant 1.000000e+00 : f32
    %1 = vector.broadcast %cst : f32 to vector<16x128xf32>
    %2 = arith.addf %1, %0 : vector<16x128xf32>
    %cst_1 = arith.constant 2.000000e+00 : f32
    %3 = vector.broadcast %cst_1 : f32 to vector<16x128xf32>
    %4 = arith.subf %3, %2 : vector<16x128xf32>
    %cst_2 = arith.constant 0.000000e+00 : f32
    %5 = vector.broadcast %cst_2 : f32 to vector<16x128xf32>
    %6 = arith.subf %5, %2 : vector<16x128xf32>
    %7 = math.absf %0 : vector<16x128xf32>
    %cst_3 = arith.constant 5.000000e-02 : f32
    %8 = vector.broadcast %cst_3 : f32 to vector<16x128xf32>
    %9 = arith.mulf %8, %7 : vector<16x128xf32>
    %cst_4 = arith.constant 0.000000e+00 : f32
    %10 = vector.broadcast %cst_4 : f32 to vector<16x128xf32>
    %cst_5 = arith.constant 0.000000e+00 : f32
    %11 = vector.broadcast %cst_5 : f32 to vector<16x128xf32>
    %c0_6 = arith.constant 0 : index
    %c0_7 = arith.constant 0 : index
    %c0_8 = arith.constant 0 : index
    %12 = vector.load %arg2[%c0_6, %c0_7, %c0_8] : memref<8x16x128xi8, #tpu.memory_space<vmem>>, vector<1x16x128xi8>
    %13 = vector.shape_cast %12 : vector<1x16x128xi8> to vector<16x128xi8>
    %c0_i8 = arith.constant 0 : i8
    %14 = vector.broadcast %c0_i8 : i8 to vector<16x128xi8>
    %15 = arith.cmpi ne, %13, %14 : vector<16x128xi8>
    %16 = arith.select %15, %4, %6 : vector<16x128xi1>, vector<16x128xf32>
    %17 = arith.addf %10, %16 : vector<16x128xf32>
    %18 = math.absf %17 : vector<16x128xf32>
    %cst_9 = arith.constant 1.000000e+00 : f32
    %19 = vector.broadcast %cst_9 : f32 to vector<16x128xf32>
    %20 = arith.mulf %19, %9 : vector<16x128xf32>
    %21 = arith.cmpf ogt, %18, %20 : vector<16x128xf32>
    %cst_10 = arith.constant 1.000000e+00 : f32
    %22 = vector.broadcast %cst_10 : f32 to vector<16x128xf32>
    %23 = arith.select %21, %22, %11 : vector<16x128xi1>, vector<16x128xf32>
    %c1 = arith.constant 1 : index
    %c0_11 = arith.constant 0 : index
    %c0_12 = arith.constant 0 : index
    %24 = vector.load %arg2[%c1, %c0_11, %c0_12] : memref<8x16x128xi8, #tpu.memory_space<vmem>>, vector<1x16x128xi8>
    %25 = vector.shape_cast %24 : vector<1x16x128xi8> to vector<16x128xi8>
    %c0_i8_13 = arith.constant 0 : i8
    %26 = vector.broadcast %c0_i8_13 : i8 to vector<16x128xi8>
    %27 = arith.cmpi ne, %25, %26 : vector<16x128xi8>
    %28 = arith.select %27, %4, %6 : vector<16x128xi1>, vector<16x128xf32>
    %29 = arith.addf %17, %28 : vector<16x128xf32>
    %30 = math.absf %29 : vector<16x128xf32>
    %cst_14 = arith.constant 2.000000e+00 : f32
    %31 = vector.broadcast %cst_14 : f32 to vector<16x128xf32>
    %32 = arith.mulf %31, %9 : vector<16x128xf32>
    %33 = arith.cmpf ogt, %30, %32 : vector<16x128xf32>
    %cst_15 = arith.constant 2.000000e+00 : f32
    %34 = vector.broadcast %cst_15 : f32 to vector<16x128xf32>
    %35 = arith.select %33, %34, %23 : vector<16x128xi1>, vector<16x128xf32>
    %c2 = arith.constant 2 : index
    %c0_16 = arith.constant 0 : index
    %c0_17 = arith.constant 0 : index
    %36 = vector.load %arg2[%c2, %c0_16, %c0_17] : memref<8x16x128xi8, #tpu.memory_space<vmem>>, vector<1x16x128xi8>
    %37 = vector.shape_cast %36 : vector<1x16x128xi8> to vector<16x128xi8>
    %c0_i8_18 = arith.constant 0 : i8
    %38 = vector.broadcast %c0_i8_18 : i8 to vector<16x128xi8>
    %39 = arith.cmpi ne, %37, %38 : vector<16x128xi8>
    %40 = arith.select %39, %4, %6 : vector<16x128xi1>, vector<16x128xf32>
    %41 = arith.addf %29, %40 : vector<16x128xf32>
    %42 = math.absf %41 : vector<16x128xf32>
    %cst_19 = arith.constant 3.000000e+00 : f32
    %43 = vector.broadcast %cst_19 : f32 to vector<16x128xf32>
    %44 = arith.mulf %43, %9 : vector<16x128xf32>
    %45 = arith.cmpf ogt, %42, %44 : vector<16x128xf32>
    %cst_20 = arith.constant 3.000000e+00 : f32
    %46 = vector.broadcast %cst_20 : f32 to vector<16x128xf32>
    %47 = arith.select %45, %46, %35 : vector<16x128xi1>, vector<16x128xf32>
    %c3 = arith.constant 3 : index
    %c0_21 = arith.constant 0 : index
    %c0_22 = arith.constant 0 : index
    %48 = vector.load %arg2[%c3, %c0_21, %c0_22] : memref<8x16x128xi8, #tpu.memory_space<vmem>>, vector<1x16x128xi8>
    %49 = vector.shape_cast %48 : vector<1x16x128xi8> to vector<16x128xi8>
    %c0_i8_23 = arith.constant 0 : i8
    %50 = vector.broadcast %c0_i8_23 : i8 to vector<16x128xi8>
    %51 = arith.cmpi ne, %49, %50 : vector<16x128xi8>
    %52 = arith.select %51, %4, %6 : vector<16x128xi1>, vector<16x128xf32>
    %53 = arith.addf %41, %52 : vector<16x128xf32>
    %54 = math.absf %53 : vector<16x128xf32>
    %cst_24 = arith.constant 4.000000e+00 : f32
    %55 = vector.broadcast %cst_24 : f32 to vector<16x128xf32>
    %56 = arith.mulf %55, %9 : vector<16x128xf32>
    %57 = arith.cmpf ogt, %54, %56 : vector<16x128xf32>
    %cst_25 = arith.constant 4.000000e+00 : f32
    %58 = vector.broadcast %cst_25 : f32 to vector<16x128xf32>
    %59 = arith.select %57, %58, %47 : vector<16x128xi1>, vector<16x128xf32>
    %c4 = arith.constant 4 : index
    %c0_26 = arith.constant 0 : index
    %c0_27 = arith.constant 0 : index
    %60 = vector.load %arg2[%c4, %c0_26, %c0_27] : memref<8x16x128xi8, #tpu.memory_space<vmem>>, vector<1x16x128xi8>
    %61 = vector.shape_cast %60 : vector<1x16x128xi8> to vector<16x128xi8>
    %c0_i8_28 = arith.constant 0 : i8
    %62 = vector.broadcast %c0_i8_28 : i8 to vector<16x128xi8>
    %63 = arith.cmpi ne, %61, %62 : vector<16x128xi8>
    %64 = arith.select %63, %4, %6 : vector<16x128xi1>, vector<16x128xf32>
    %65 = arith.addf %53, %64 : vector<16x128xf32>
    %66 = math.absf %65 : vector<16x128xf32>
    %cst_29 = arith.constant 5.000000e+00 : f32
    %67 = vector.broadcast %cst_29 : f32 to vector<16x128xf32>
    %68 = arith.mulf %67, %9 : vector<16x128xf32>
    %69 = arith.cmpf ogt, %66, %68 : vector<16x128xf32>
    %cst_30 = arith.constant 5.000000e+00 : f32
    %70 = vector.broadcast %cst_30 : f32 to vector<16x128xf32>
    %71 = arith.select %69, %70, %59 : vector<16x128xi1>, vector<16x128xf32>
    %c5 = arith.constant 5 : index
    %c0_31 = arith.constant 0 : index
    %c0_32 = arith.constant 0 : index
    %72 = vector.load %arg2[%c5, %c0_31, %c0_32] : memref<8x16x128xi8, #tpu.memory_space<vmem>>, vector<1x16x128xi8>
    %73 = vector.shape_cast %72 : vector<1x16x128xi8> to vector<16x128xi8>
    %c0_i8_33 = arith.constant 0 : i8
    %74 = vector.broadcast %c0_i8_33 : i8 to vector<16x128xi8>
    %75 = arith.cmpi ne, %73, %74 : vector<16x128xi8>
    %76 = arith.select %75, %4, %6 : vector<16x128xi1>, vector<16x128xf32>
    %77 = arith.addf %65, %76 : vector<16x128xf32>
    %78 = math.absf %77 : vector<16x128xf32>
    %cst_34 = arith.constant 6.000000e+00 : f32
    %79 = vector.broadcast %cst_34 : f32 to vector<16x128xf32>
    %80 = arith.mulf %79, %9 : vector<16x128xf32>
    %81 = arith.cmpf ogt, %78, %80 : vector<16x128xf32>
    %cst_35 = arith.constant 6.000000e+00 : f32
    %82 = vector.broadcast %cst_35 : f32 to vector<16x128xf32>
    %83 = arith.select %81, %82, %71 : vector<16x128xi1>, vector<16x128xf32>
    %c6 = arith.constant 6 : index
    %c0_36 = arith.constant 0 : index
    %c0_37 = arith.constant 0 : index
    %84 = vector.load %arg2[%c6, %c0_36, %c0_37] : memref<8x16x128xi8, #tpu.memory_space<vmem>>, vector<1x16x128xi8>
    %85 = vector.shape_cast %84 : vector<1x16x128xi8> to vector<16x128xi8>
    %c0_i8_38 = arith.constant 0 : i8
    %86 = vector.broadcast %c0_i8_38 : i8 to vector<16x128xi8>
    %87 = arith.cmpi ne, %85, %86 : vector<16x128xi8>
    %88 = arith.select %87, %4, %6 : vector<16x128xi1>, vector<16x128xf32>
    %89 = arith.addf %77, %88 : vector<16x128xf32>
    %90 = math.absf %89 : vector<16x128xf32>
    %cst_39 = arith.constant 7.000000e+00 : f32
    %91 = vector.broadcast %cst_39 : f32 to vector<16x128xf32>
    %92 = arith.mulf %91, %9 : vector<16x128xf32>
    %93 = arith.cmpf ogt, %90, %92 : vector<16x128xf32>
    %cst_40 = arith.constant 7.000000e+00 : f32
    %94 = vector.broadcast %cst_40 : f32 to vector<16x128xf32>
    %95 = arith.select %93, %94, %83 : vector<16x128xi1>, vector<16x128xf32>
    %c7 = arith.constant 7 : index
    %c0_41 = arith.constant 0 : index
    %c0_42 = arith.constant 0 : index
    %96 = vector.load %arg2[%c7, %c0_41, %c0_42] : memref<8x16x128xi8, #tpu.memory_space<vmem>>, vector<1x16x128xi8>
    %97 = vector.shape_cast %96 : vector<1x16x128xi8> to vector<16x128xi8>
    %c0_i8_43 = arith.constant 0 : i8
    %98 = vector.broadcast %c0_i8_43 : i8 to vector<16x128xi8>
    %99 = arith.cmpi ne, %97, %98 : vector<16x128xi8>
    %100 = arith.select %99, %4, %6 : vector<16x128xi1>, vector<16x128xf32>
    %101 = arith.addf %89, %100 : vector<16x128xf32>
    %102 = math.absf %101 : vector<16x128xf32>
    %cst_44 = arith.constant 8.000000e+00 : f32
    %103 = vector.broadcast %cst_44 : f32 to vector<16x128xf32>
    %104 = arith.mulf %103, %9 : vector<16x128xf32>
    %105 = arith.cmpf ogt, %102, %104 : vector<16x128xf32>
    %cst_45 = arith.constant 8.000000e+00 : f32
    %106 = vector.broadcast %cst_45 : f32 to vector<16x128xf32>
    %107 = arith.select %105, %106, %95 : vector<16x128xi1>, vector<16x128xf32>
    %cst_46 = arith.constant 1.000000e+00 : f32
    %108 = vector.broadcast %cst_46 : f32 to vector<16x128xf32>
    %109 = arith.maximumf %107, %108 : vector<16x128xf32>
    %cst_47 = arith.constant 1.250000e-01 : f32
    %110 = vector.broadcast %cst_47 : f32 to vector<16x128xf32>
    %111 = arith.mulf %109, %110 : vector<16x128xf32>
    %cst_48 = arith.constant 1.000000e+00 : f32
    %112 = vector.broadcast %cst_48 : f32 to vector<16x128xf32>
    %113 = arith.subf %112, %111 : vector<16x128xf32>
    %c0_49 = arith.constant 0 : index
    %c0_50 = arith.constant 0 : index
    %114 = vector.load %arg3[%c0_49, %c0_50] : memref<16x128xf32, #tpu.memory_space<vmem>>, vector<16x128xf32>
    tpu.vector_store %arg3[%c0_49, %c0_50], %113 {strides = array<i32>} : memref<16x128xf32, #tpu.memory_space<vmem>>, vector<16x128xf32>,
    return
  }
  func.func @transform_0(%arg0: i32) -> (i32, i32) {
    %c0_i32 = arith.constant 0 : i32
    %c0_i32_0 = arith.constant 0 : i32
    return %arg0, %c0_i32 : i32, i32
  }
  func.func @transform_1(%arg0: i32) -> (i32, i32, i32) {
    %c0_i32 = arith.constant 0 : i32
    %c0_i32_0 = arith.constant 0 : i32
    %c0_i32_1 = arith.constant 0 : i32
    return %c0_i32, %arg0, %c0_i32_0 : i32, i32, i32
  }
  func.func @transform_2(%arg0: i32) -> (i32, i32) {
    %c0_i32 = arith.constant 0 : i32
    %c0_i32_0 = arith.constant 0 : i32
    return %arg0, %c0_i32 : i32, i32
  }
}

</mosaic_0001>

<llo_original>
// kernel: tpu_custom_call.1
$region0: #{tpu_custom_call.1}
  #allocation0 [shape = 'u32[]', space=smem, size = 0x4, offset = 0x4, fixed_abs, tag = 'smem constant byte address 0x4 - core index']
  #allocation1 [shape = 'u32[72,128]{1,0:T(1,128)}', space=vmem, size = 0x9000, scoped, tag = 'internal scratch']
  %s0 = inlined_call_operand.hbm [shape: f32[16,128], index: 0, kind: input, shape index: {}]
  %s1 = inlined_call_operand.hbm [shape: s8[8,16,128], index: 1, kind: input, shape index: {}]
  %s2 = inlined_call_operand.hbm [shape: f32[16,128], index: 2, kind: output, shape index: {}]
  %s3 = sld [smem:[#allocation0]]
  $region26: #{tpu_custom_call.1} parent=0
    _
  %s5 = ssub.s32 1, %s3
  %s6 = scalar_select 0, %s5, %s3
  $region1: #{tpu_custom_call.1} parent=0
    #allocation2 [shape = 'u8[8192]{0}', space=vmem, size = 0x2000, scoped, tag = 'input window, operand 0, single buffered']
    #allocation3 [shape = 's32[1]{0}', space=sflag, size = 0x4, scoped, tag = 'scoped memory for tpu_custom_call.1']
    #allocation4 [shape = 's32[1]{0}', space=sflag, size = 0x4, scoped, tag = 'scoped memory for tpu_custom_call.1']
    #allocation5 [shape = 'u8[16384]{0}', space=vmem, size = 0x4000, scoped, tag = 'input window, operand 1, single buffered']
    #allocation6 [shape = 's32[1]{0}', space=sflag, size = 0x4, scoped, tag = 'scoped memory for tpu_custom_call.1']
    #allocation7 [shape = 'u8[8192]{0}', space=vmem, size = 0x2000, scoped, tag = 'output window, operand 0, single buffered']
    %7 = vsyncpa [#allocation3], 0
    %8 = vsyncpa [#allocation6], 0
    %9 = vsyncpa [#allocation4], 0
    // Predicated region
    $region2: #{tpu_custom_call.1} parent=1 // pred_check
      _
    $region3: #{tpu_custom_call.1} parent=1 // pred_check_branch
      %11 = sbr.rel (0) target = $region5
    $region4: #{tpu_custom_call.1} parent=1 // pred_region
      %13 = vsyncadd [#allocation3], 0
      %s14 = sshll.u32 %s0, 4
      %s15 = int_to_ptr.hbm [resolvable:$true] %s14
      %s16 = sshll.u32 [#allocation2], 4
      %s17 = int_to_ptr.vmem [resolvable:$true] %s16
      %22 = dma.hbm_to_vmem [thread:$0]  %s15, 256, %s17, [#allocation3], 128, 128, 8
    $region5: #{tpu_custom_call.1} parent=1 // pred_fallthru
      _
    // Predicated region
    $region6: #{tpu_custom_call.1} parent=1 // pred_check
      _
    $region7: #{tpu_custom_call.1} parent=1 // pred_check_branch
      %24 = sbr.rel (0) target = $region9
    $region8: #{tpu_custom_call.1} parent=1 // pred_region
      %26 = vsyncadd [#allocation6], 0
      %s27 = sshll.u32 %s1, 4
      %s28 = int_to_ptr.hbm [resolvable:$true] %s27
      %s29 = sshll.u32 [#allocation5], 4
      %s30 = int_to_ptr.vmem [resolvable:$true] %s29
      %35 = dma.hbm_to_vmem [thread:$0]  %s28, 512, %s30, [#allocation6], 32, 32, 2
    $region9: #{tpu_custom_call.1} parent=1 // pred_fallthru
      _
    // Predicated region
    $region10: #{tpu_custom_call.1} parent=1 // pred_check
      _
    $region11: #{tpu_custom_call.1} parent=1 // pred_check_branch
      %37 = sbr.rel (0) target = $region13
    $region12: #{tpu_custom_call.1} parent=1 // pred_region
      %39 = dma.done [#allocation3], 256
    $region13: #{tpu_custom_call.1} parent=1 // pred_fallthru
      _
    // Predicated region
    $region14: #{tpu_custom_call.1} parent=1 // pred_check
      _
    $region15: #{tpu_custom_call.1} parent=1 // pred_check_branch
      %41 = sbr.rel (0) target = $region17
    $region16: #{tpu_custom_call.1} parent=1 // pred_region
      %43 = dma.done [#allocation6], 512
    $region17: #{tpu_custom_call.1} parent=1 // pred_fallthru
      _
    %v46 = vld [vmem:[#allocation2] sm:$0xff]
    %v47 = vld [vmem:[#allocation2 + $0x8] sm:$0xff]
    %v48 = vadd.f32 %v46, 1.0
    %v49 = vadd.f32 %v47, 1.0
    %v50 = vsub.f32 2.0, %v48
    %v51 = vsub.f32 2.0, %v49
    %v52 = vsub.f32 0.0, %v48
    %v53 = vsub.f32 0.0, %v49
    %v54 = vand.u32 2147483647, %v46
    %v55 = vand.u32 2147483647, %v47
    %v56 = vmul.f32 %v54, 0.05
    %v57 = vmul.f32 %v55, 0.05
    %v58 = vld [vmem:[#allocation5] sm:$0x3]
    %v59 = vld [vmem:[#allocation5 + $0x2] sm:$0x3]
    %vm60 = vnez %v58
    %vm61 = vnez %v59
    %v62 = vsel %vm60, 16843009, 0
    %v63 = vsel %vm61, 16843009, 0
    %v64 = vunpack.c.0.s8 %v62
    %v65 = vunpack.c.0.s8 %v63
    %vm66 = vcmp.ne.s32.totalorder %v64, 0
    %vm67 = vcmp.ne.s32.totalorder %v65, 0
    %v68 = vsel %vm66, %v50, %v52
    %v69 = vsel %vm67, %v51, %v53
    %v70 = vadd.f32 %v68, 0.0
    %v71 = vadd.f32 %v69, 0.0
    %v72 = vand.u32 2147483647, %v70
    %v73 = vand.u32 2147483647, %v71
    %vm74 = vcmp.gt.f32.partialorder %v72, %v56
    %vm75 = vcmp.gt.f32.partialorder %v73, %v57
    %v76 = vsel %vm74, 1.0, 0.0
    %v77 = vsel %vm75, 1.0, 0.0
    %s78 = scalar_lea.vmem [#allocation5], 4
    %v79 = vld [vmem:[%s78] sm:$0x3]
    %v80 = vld [vmem:[%s78 + $0x2] sm:$0x3]
    %vm81 = vnez %v79
    %vm82 = vnez %v80
    %v83 = vsel %vm81, 16843009, 0
    %v84 = vsel %vm82, 16843009, 0
    %v85 = vunpack.c.0.s8 %v83
    %v86 = vunpack.c.0.s8 %v84
    %vm87 = vcmp.ne.s32.totalorder %v85, 0
    %vm88 = vcmp.ne.s32.totalorder %v86, 0
    %v89 = vsel %vm87, %v50, %v52
    %v90 = vsel %vm88, %v51, %v53
    %v91 = vadd.f32 %v70, %v89
    %v92 = vadd.f32 %v71, %v90
    %v93 = vand.u32 2147483647, %v91
    %v94 = vand.u32 2147483647, %v92
    %v95 = vmul.f32 %v56, 2.0
    %v96 = vmul.f32 %v57, 2.0
    %vm97 = vcmp.gt.f32.partialorder %v93, %v95
    %vm98 = vcmp.gt.f32.partialorder %v94, %v96
    %v99 = vsel %vm97, 2.0, %v76
    %v100 = vsel %vm98, 2.0, %v77
    %s101 = scalar_lea.vmem [#allocation5], 8
    %v102 = vld [vmem:[%s101] sm:$0x3]
    %v103 = vld [vmem:[%s101 + $0x2] sm:$0x3]
    %vm104 = vnez %v102
    %vm105 = vnez %v103
    %v106 = vsel %vm104, 16843009, 0
    %v107 = vsel %vm105, 16843009, 0
    %v108 = vunpack.c.0.s8 %v106
    %v109 = vunpack.c.0.s8 %v107
    %vm110 = vcmp.ne.s32.totalorder %v108, 0
    %vm111 = vcmp.ne.s32.totalorder %v109, 0
    %v112 = vsel %vm110, %v50, %v52
    %v113 = vsel %vm111, %v51, %v53
    %v114 = vadd.f32 %v91, %v112
    %v115 = vadd.f32 %v92, %v113
    %v116 = vand.u32 2147483647, %v114
    %v117 = vand.u32 2147483647, %v115
    %v118 = vmul.f32 %v56, 3.0
    %v119 = vmul.f32 %v57, 3.0
    %vm120 = vcmp.gt.f32.partialorder %v116, %v118
    %vm121 = vcmp.gt.f32.partialorder %v117, %v119
    %v122 = vsel %vm120, 3.0, %v99
    %v123 = vsel %vm121, 3.0, %v100
    %s124 = scalar_lea.vmem [#allocation5], 12
    %v125 = vld [vmem:[%s124] sm:$0x3]
    %v126 = vld [vmem:[%s124 + $0x2] sm:$0x3]
    %vm127 = vnez %v125
    %vm128 = vnez %v126
    %v129 = vsel %vm127, 16843009, 0
    %v130 = vsel %vm128, 16843009, 0
    %v131 = vunpack.c.0.s8 %v129
    %v132 = vunpack.c.0.s8 %v130
    %vm133 = vcmp.ne.s32.totalorder %v131, 0
    %vm134 = vcmp.ne.s32.totalorder %v132, 0
    %v135 = vsel %vm133, %v50, %v52
    %v136 = vsel %vm134, %v51, %v53
    %v137 = vadd.f32 %v114, %v135
    %v138 = vadd.f32 %v115, %v136
    %v139 = vand.u32 2147483647, %v137
    %v140 = vand.u32 2147483647, %v138
    %v141 = vmul.f32 %v56, 4.0
    %v142 = vmul.f32 %v57, 4.0
    %vm143 = vcmp.gt.f32.partialorder %v139, %v141
    %vm144 = vcmp.gt.f32.partialorder %v140, %v142
    %v145 = vsel %vm143, 4.0, %v122
    %v146 = vsel %vm144, 4.0, %v123
    %s147 = scalar_lea.vmem [#allocation5], 16
    %v148 = vld [vmem:[%s147] sm:$0x3]
    %v149 = vld [vmem:[%s147 + $0x2] sm:$0x3]
    %vm150 = vnez %v148
    %vm151 = vnez %v149
    %v152 = vsel %vm150, 16843009, 0
    %v153 = vsel %vm151, 16843009, 0
    %v154 = vunpack.c.0.s8 %v152
    %v155 = vunpack.c.0.s8 %v153
    %vm156 = vcmp.ne.s32.totalorder %v154, 0
    %vm157 = vcmp.ne.s32.totalorder %v155, 0
    %v158 = vsel %vm156, %v50, %v52
    %v159 = vsel %vm157, %v51, %v53
    %v160 = vadd.f32 %v137, %v158
    %v161 = vadd.f32 %v138, %v159
    %v162 = vand.u32 2147483647, %v160
    %v163 = vand.u32 2147483647, %v161
    %v164 = vmul.f32 %v56, 5.0
    %v165 = vmul.f32 %v57, 5.0
    %vm166 = vcmp.gt.f32.partialorder %v162, %v164
    %vm167 = vcmp.gt.f32.partialorder %v163, %v165
    %v168 = vsel %vm166, 5.0, %v145
    %v169 = vsel %vm167, 5.0, %v146
    %s170 = scalar_lea.vmem [#allocation5], 20
    %v171 = vld [vmem:[%s170] sm:$0x3]
    %v172 = vld [vmem:[%s170 + $0x2] sm:$0x3]
    %vm173 = vnez %v171
    %vm174 = vnez %v172
    %v175 = vsel %vm173, 16843009, 0
    %v176 = vsel %vm174, 16843009, 0
    %v177 = vunpack.c.0.s8 %v175
    %v178 = vunpack.c.0.s8 %v176
    %vm179 = vcmp.ne.s32.totalorder %v177, 0
    %vm180 = vcmp.ne.s32.totalorder %v178, 0
    %v181 = vsel %vm179, %v50, %v52
    %v182 = vsel %vm180, %v51, %v53
    %v183 = vadd.f32 %v160, %v181
    %v184 = vadd.f32 %v161, %v182
    %v185 = vand.u32 2147483647, %v183
    %v186 = vand.u32 2147483647, %v184
    %v187 = vmul.f32 %v56, 6.0
    %v188 = vmul.f32 %v57, 6.0
    %vm189 = vcmp.gt.f32.partialorder %v185, %v187
    %vm190 = vcmp.gt.f32.partialorder %v186, %v188
    %v191 = vsel %vm189, 6.0, %v168
    %v192 = vsel %vm190, 6.0, %v169
    %s193 = scalar_lea.vmem [#allocation5], 24
    %v194 = vld [vmem:[%s193] sm:$0x3]
    %v195 = vld [vmem:[%s193 + $0x2] sm:$0x3]
    %vm196 = vnez %v194
    %vm197 = vnez %v195
    %v198 = vsel %vm196, 16843009, 0
    %v199 = vsel %vm197, 16843009, 0
    %v200 = vunpack.c.0.s8 %v198
    %v201 = vunpack.c.0.s8 %v199
    %vm202 = vcmp.ne.s32.totalorder %v200, 0
    %vm203 = vcmp.ne.s32.totalorder %v201, 0
    %v204 = vsel %vm202, %v50, %v52
    %v205 = vsel %vm203, %v51, %v53
    %v206 = vadd.f32 %v183, %v204
    %v207 = vadd.f32 %v184, %v205
    %v208 = vand.u32 2147483647, %v206
    %v209 = vand.u32 2147483647, %v207
    %v210 = vmul.f32 %v56, 7.0
    %v211 = vmul.f32 %v57, 7.0
    %vm212 = vcmp.gt.f32.partialorder %v208, %v210
    %vm213 = vcmp.gt.f32.partialorder %v209, %v211
    %v214 = vsel %vm212, 7.0, %v191
    %v215 = vsel %vm213, 7.0, %v192
    %s216 = scalar_lea.vmem [#allocation5], 28
    %v217 = vld [vmem:[%s216] sm:$0x3]
    %v218 = vld [vmem:[%s216 + $0x2] sm:$0x3]
    %vm219 = vnez %v217
    %vm220 = vnez %v218
    %v221 = vsel %vm219, 16843009, 0
    %v222 = vsel %vm220, 16843009, 0
    %v223 = vunpack.c.0.s8 %v221
    %v224 = vunpack.c.0.s8 %v222
    %vm225 = vcmp.ne.s32.totalorder %v223, 0
    %vm226 = vcmp.ne.s32.totalorder %v224, 0
    %v227 = vsel %vm225, %v50, %v52
    %v228 = vsel %vm226, %v51, %v53
    %v229 = vadd.f32 %v206, %v227
    %v230 = vadd.f32 %v207, %v228
    %v231 = vand.u32 2147483647, %v229
    %v232 = vand.u32 2147483647, %v230
    %v233 = vmul.f32 %v56, 8.0
    %v234 = vmul.f32 %v57, 8.0
    %vm235 = vcmp.gt.f32.partialorder %v231, %v233
    %vm236 = vcmp.gt.f32.partialorder %v232, %v234
    %v237 = vsel %vm235, 8.0, %v214
    %v238 = vsel %vm236, 8.0, %v215
    %v239 = vmax.f32 %v237, 1.0
    %v240 = vmax.f32 %v238, 1.0
    %v241 = vmul.f32 %v239, 0.125
    %v242 = vmul.f32 %v240, 0.125
    %v243 = vsub.f32 1.0, %v241
    %v244 = vsub.f32 1.0, %v242
    %245 = vst [vmem:[#allocation7] sm:$0xff] %v243
    %246 = vst [vmem:[#allocation7 + $0x8] sm:$0xff] %v244
    // Predicated region
    $region18: #{tpu_custom_call.1} parent=1 // pred_check
      _
    $region19: #{tpu_custom_call.1} parent=1 // pred_check_branch
      %248 = sbr.rel (0) target = $region21
    $region20: #{tpu_custom_call.1} parent=1 // pred_region
      %250 = vsyncadd [#allocation4], 0
      %s251 = sshll.u32 [#allocation7], 4
      %s252 = int_to_ptr.vmem [resolvable:$true] %s251
      %s253 = sshll.u32 %s2, 4
      %s254 = int_to_ptr.hbm [resolvable:$true] %s253
      %259 = dma.vmem_to_hbm [thread:$0]  %s252, 256, %s254, [#allocation4], 128, 128, 8
    $region21: #{tpu_custom_call.1} parent=1 // pred_fallthru
      _
    // Predicated region
    $region22: #{tpu_custom_call.1} parent=1 // pred_check
      _
    $region23: #{tpu_custom_call.1} parent=1 // pred_check_branch
      %261 = sbr.rel (0) target = $region25
    $region24: #{tpu_custom_call.1} parent=1 // pred_region
      %263 = dma.done [#allocation4], 256
    $region25: #{tpu_custom_call.1} parent=1 // pred_fallthru
      _
    %264 = vsyncpa [#allocation3], 1
    %265 = vsyncpa [#allocation6], 1
    %266 = vsyncpa [#allocation4], 1

</llo_original>
